<compile_context>
chip_gen: v5e
topology: v5e:2x2
jax: 0.10.0
libtpu: 0.0.40
codegen_flags: <defaults>
</compile_context>

<pallas_src>
import functools

import jax
import jax.numpy as jnp
from jax.experimental import pallas as pl
from jax.experimental.pallas import tpu as pltpu

PRE_SCALE = 2.0
PRE_SHIFT = 1.0


def _adaptor_kernel(x_ref, w_ref, b_ref, o_ref):
    # x_ref: (TM, Hp_in)     packed activations
    # w_ref: (Hp_in, Hp_out) pre-transposed, block-diagonal, affine-folded weight
    # b_ref: (1, Hp_out)     packed, affine-folded bias
    y = jnp.dot(x_ref[...], w_ref[...], preferred_element_type=jnp.float32)
    o_ref[...] = (y + b_ref[...]).astype(o_ref.dtype)


def _round_up(n, m):
    return ((n + m - 1) // m) * m


@functools.partial(jax.jit, static_argnames=())
def _linear_with_affine_pre(x, weight, bias):
    """y = (PRE_SCALE*x + PRE_SHIFT) @ weight.T + bias, via a Pallas kernel."""
    B, S, H_in = x.shape
    H_out = weight.shape[0]
    M = B * S

    # --- One-time constant folds on the tiny weight (not per-activation work) ---
    # Fold the affine preprocessing:
    #   (s*x + t) @ W.T + b == x @ (s*W).T + (t*W.sum(1) + b)
    w_eff = (PRE_SCALE * weight).astype(jnp.float32)                 # (H_out, H_in)
    b_eff = (bias.astype(jnp.float32)
             + PRE_SHIFT * weight.astype(jnp.float32).sum(axis=1))   # (H_out,)
    wt = w_eff.T                                                     # (H_in, H_out)

    # --- Lane-dense packing: fold P tokens into one 128-wide row ---
    if 128 % H_in == 0 and 128 % H_out == 0:
        P = min(128 // H_in, 128 // H_out)
    else:
        P = 1
    Hp_in, Hp_out = P * H_in, P * H_out

    # Block-diagonal packed weight (P copies of wt on the diagonal) + packed bias.
    w_packed = jnp.kron(jnp.eye(P, dtype=wt.dtype), wt)              # (Hp_in, Hp_out)
    b_packed = jnp.tile(b_eff, P).reshape(1, Hp_out)                 # (1, Hp_out)

    # --- Tile the (packed) token axis ---
    rows = -(-M // P)                                # packed rows needed
    TM = min(512, _round_up(max(rows, 1), 8))        # 512*128*4B = 256 KiB / tile buffer
    n_tiles = -(-rows // TM)
    rows_pad = n_tiles * TM
    M_pad = rows_pad * P

    x2d = x.reshape(M, H_in).astype(jnp.float32)
    if M_pad != M:
        x2d = jnp.pad(x2d, ((0, M_pad - M), (0, 0)))
    x_packed = x2d.reshape(rows_pad, Hp_in)

    out_packed = pl.pallas_call(
        _adaptor_kernel,
        out_shape=jax.ShapeDtypeStruct((rows_pad, Hp_out), x.dtype),
        grid=(n_tiles,),
        in_specs=[
            # Token tiles stream through VMEM (double-buffered by Pallas).
            pl.BlockSpec((TM, Hp_in), lambda i: (i, 0)),
            # Weight / bias: same block every iteration -> resident in VMEM.
            pl.BlockSpec((Hp_in, Hp_out), lambda i: (0, 0)),
            pl.BlockSpec((1, Hp_out), lambda i: (0, 0)),
        ],
        out_specs=pl.BlockSpec((TM, Hp_out), lambda i: (i, 0)),
        compiler_params=pltpu.CompilerParams(
            # Independent tiles -> "parallel" lets v7x shard across both TCs.
            dimension_semantics=("parallel",),
        ),
    )(x_packed, w_packed, b_packed)

    out2d = out_packed.reshape(M_pad, H_out)[:M]
    return out2d.reshape(B, S, H_out)


def model_batch_adaptor_forward(batch, input_names, weight, bias):
    """Equivalent of ModelBatchAdaptor.forward with the concrete base model above.

    batch:  dict name -> array; the named input has shape (B, S, H_in)
    weight: (H_out, H_in)   (torch.nn.Linear layout)
    bias:   (H_out,)
    """
    # Adaptor glue: gather the named inputs (pure Python, stays in the wrapper).
    # The preprocessing_fn itself is folded into the weights inside the jitted fn.
    inputs = [batch[name] for name in input_names]
    (x,) = inputs  # single-input base model
    return _linear_with_affine_pre(x, weight, bias)


if __name__ == "__main__":
    key = jax.random.PRNGKey(0)
    kx, kw, kb = jax.random.split(key, 3)

    B, S, H_in, H_out = 2, 8, 32, 32
    x = jax.random.normal(kx, (B, S, H_in), dtype=jnp.float32)
    weight = jax.random.normal(kw, (H_out, H_in), dtype=jnp.float32) * 0.05
    bias = jax.random.normal(kb, (H_out,), dtype=jnp.float32) * 0.05

    batch = {"x": x, "unused_label": jnp.zeros((B,), jnp.int32)}
    input_names = ("x",)

    out = model_batch_adaptor_forward(batch, input_names, weight, bias)
    out = jax.block_until_ready(out)

    # Reference check in plain JAX (preprocessing_fn -> Linear), unfused.
    ref = (x * PRE_SCALE + PRE_SHIFT) @ weight.T + bias
    assert out.shape == (B, S, H_out)
    assert jnp.allclose(out, ref, atol=1e-4, rtol=1e-4)

    print("KERNEL_OK")
</pallas_src>

<mosaic_0001>
module attributes {stable_mosaic.version = 11 : i64} {
  func.func @_adaptor_kernel(%arg0: i32, %arg1: memref<8x128xf32, #tpu.memory_space<vmem>>, %arg2: memref<128x128xf32, #tpu.memory_space<vmem>>, %arg3: memref<1x128xf32, #tpu.memory_space<vmem>>, %arg4: memref<8x128xf32, #tpu.memory_space<vmem>>) attributes {dimension_semantics = [#tpu.dimension_semantics<parallel>], iteration_bounds = array<i64: 1>, scalar_prefetch = 0 : i64, scratch_operands = 0 : i64, tpu.core_type = #tpu.core_type<tc>, window_params = [{transform_indices = @transform_0, window_bounds = array<i64: 8, 128>}, {pipeline_mode = #tpu.pipeline_mode<synchronous>, transform_indices = @transform_1, window_bounds = array<i64: 128, 128>}, {pipeline_mode = #tpu.pipeline_mode<synchronous>, transform_indices = @transform_2, window_bounds = array<i64: 1, 128>}, {transform_indices = @transform_3, window_bounds = array<i64: 8, 128>}]} {
    %c0 = arith.constant 0 : index
    %c0_0 = arith.constant 0 : index
    %0 = vector.load %arg1[%c0, %c0_0] : memref<8x128xf32, #tpu.memory_space<vmem>>, vector<8x128xf32>
    %c0_1 = arith.constant 0 : index
    %c0_2 = arith.constant 0 : index
    %1 = vector.load %arg2[%c0_1, %c0_2] : memref<128x128xf32, #tpu.memory_space<vmem>>, vector<128x128xf32>
    %cst = arith.constant dense<0.000000e+00> : vector<8x128xf32>
    %2 = tpu.matmul %0, %1, %cst {dimension_numbers = #tpu.dot_dimension_numbers<[1], [0], [0], [1], [0, 0, 1, 1], [], []>} : vector<8x128xf32>, vector<128x128xf32>, vector<8x128xf32> -> vector<8x128xf32>
    %c0_3 = arith.constant 0 : index
    %c0_4 = arith.constant 0 : index
    %3 = vector.load %arg3[%c0_3, %c0_4] : memref<1x128xf32, #tpu.memory_space<vmem>>, vector<1x128xf32>
    %4 = vector.broadcast %3 : vector<1x128xf32> to vector<8x128xf32>
    %5 = arith.addf %2, %4 : vector<8x128xf32>
    %c0_5 = arith.constant 0 : index
    %c0_6 = arith.constant 0 : index
    %6 = vector.load %arg4[%c0_5, %c0_6] : memref<8x128xf32, #tpu.memory_space<vmem>>, vector<8x128xf32>
    tpu.vector_store %arg4[%c0_5, %c0_6], %5 {strides = array<i32>} : memref<8x128xf32, #tpu.memory_space<vmem>>, vector<8x128xf32>,
    return
  }
  func.func @transform_0(%arg0: i32) -> (i32, i32) {
    %c0_i32 = arith.constant 0 : i32
    %c0_i32_0 = arith.constant 0 : i32
    return %arg0, %c0_i32 : i32, i32
  }
  func.func @transform_1(%arg0: i32) -> (i32, i32) {
    %c0_i32 = arith.constant 0 : i32
    %c0_i32_0 = arith.constant 0 : i32
    %c0_i32_1 = arith.constant 0 : i32
    return %c0_i32, %c0_i32_0 : i32, i32
  }
  func.func @transform_2(%arg0: i32) -> (i32, i32) {
    %c0_i32 = arith.constant 0 : i32
    %c0_i32_0 = arith.constant 0 : i32
    %c0_i32_1 = arith.constant 0 : i32
    return %c0_i32, %c0_i32_0 : i32, i32
  }
  func.func @transform_3(%arg0: i32) -> (i32, i32) {
    %c0_i32 = arith.constant 0 : i32
    %c0_i32_0 = arith.constant 0 : i32
    return %arg0, %c0_i32 : i32, i32
  }
}

</mosaic_0001>

<llo_original>
// kernel: tile.8
$region0: #{tile.8}
  #allocation0 [shape = 's32[1]{0}', space=sflag, size = 0x4, scoped, tag = 'scoped memory for tile.8']
  %s0 = inlined_call_operand.vmem [shape: f32[32], index: 0, kind: input, shape index: {}]
  %s1 = inlined_call_operand.vmem [shape: f32[4,32], index: 1, kind: output, shape index: {}]
  // Predicated region
  $region2: #{tile.8} parent=0 // pred_check
    _
  $region3: #{tile.8} parent=0 // pred_check_branch
    %3 = sbr.rel (0) target = $region5
  $region4: #{tile.8} parent=0 // pred_region
    _
  $region5: #{tile.8} parent=0 // pred_fallthru
    _
  %v4 = vld [vmem:[%s0] ss:$0 sm:$0xff]
  %5 = vst [vmem:[%s1] sm:$0xf] %v4

// kernel: tile.9
$region0: #{tile.9}
  %s0 = inlined_call_operand.vmem [shape: f32[4,32], index: 0, kind: input, shape index: {}]
  %s1 = inlined_call_operand.vmem [shape: f32[1,128], index: 1, kind: output, shape index: {}]
  $region1: #{tile.9} parent=0
    #allocation0 [shape = 'u8[4096]{0}', space=vmem, size = 0x1000, scoped, tag = 'scoped mem for output reshape']
    #allocation1 [shape = 'u8[4096]{0}', space=vmem, size = 0x1000, scoped, tag = 'scoped mem for input reshape']
    %s3 = ssub.s32 16, 1
    %v4 = vld [vmem:[%s0] sm:%s3]
    %5 = vst [vmem:[#allocation1] sm:%s3] %v4
    %v6 = vld [vmem:[#allocation1] sm:$0x1]
    %vm7 = vcmask 261120
    %8 = vst.msk [vmem:[#allocation0] sm:$0x1] %vm7, %v6
    %s9 = scalar_lea.vmem [#allocation1], 3
    %v10 = vld [vmem:[%s9] sm:$0x1]
    %11 = vrot.lane.b32.xlu0 %v10, 96
    %v12 = vpop.permute.xlu0 %11
    %vm13 = vcmask 1048320
    %14 = vst.msk [vmem:[#allocation0] sm:$0x1] %vm13, %v12
    %s15 = scalar_lea.vmem [#allocation1], 2
    %v16 = vld [vmem:[%s15] sm:$0x1]
    %17 = vrot.lane.b32.xlu0 %v16, 64
    %v18 = vpop.permute.xlu0 %17
    %vm19 = vcmask 785920
    %20 = vst.msk [vmem:[#allocation0] sm:$0x1] %vm19, %v18
    %s21 = scalar_lea.vmem [#allocation1], 1
    %v22 = vld [vmem:[%s21] sm:$0x1]
    %23 = vrot.lane.b32.xlu0 %v22, 32
    %v24 = vpop.permute.xlu0 %23
    %vm25 = vcmask 523520
    %26 = vst.msk [vmem:[#allocation0] sm:$0x1] %vm25, %v24
    %s28 = ssub.s32 2, 1
    %v29 = vld [vmem:[#allocation0] sm:%s28]
    %s31 = ssub.s32 2, 1
    %32 = vst [vmem:[%s1] sm:%s31] %v29

// kernel: _linear_with_affine_pre.1
$region0: #{_linear_with_affine_pre.1}
  #allocation0 [shape = 'u32[]', space=smem, size = 0x4, offset = 0x4, fixed_abs, tag = 'smem constant byte address 0x4 - core index']
  #allocation1 [shape = 'u32[72,128]{1,0:T(1,128)}', space=vmem, size = 0x9000, scoped, tag = 'internal scratch']
  %s0 = inlined_call_operand.vmem [shape: f32[8,128], index: 0, kind: input, shape index: {}]
  %s1 = inlined_call_operand.vmem [shape: f32[128,128], index: 1, kind: input, shape index: {}]
  %s2 = inlined_call_operand.vmem [shape: f32[1,128], index: 2, kind: input, shape index: {}]
  %s3 = inlined_call_operand.vmem [shape: f32[8,128], index: 3, kind: output, shape index: {}]
  %s4 = sld [smem:[#allocation0]]
  $region22: #{_linear_with_affine_pre.1} parent=0
    _
  %s6 = ssub.s32 1, %s4
  %s7 = scalar_select 0, %s6, %s4
  // Predicated region
  $region2: #{_linear_with_affine_pre.1} parent=0 // pred_check
    _
  $region3: #{_linear_with_affine_pre.1} parent=0 // pred_check_branch
    %9 = sbr.rel (0) target = $region5
  $region4: #{_linear_with_affine_pre.1} parent=0 // pred_region
    _
  $region5: #{_linear_with_affine_pre.1} parent=0 // pred_fallthru
    _
  // Predicated region
  $region6: #{_linear_with_affine_pre.1} parent=0 // pred_check
    _
  $region7: #{_linear_with_affine_pre.1} parent=0 // pred_check_branch
    %11 = sbr.rel (0) target = $region9
  $region8: #{_linear_with_affine_pre.1} parent=0 // pred_region
    _
  $region9: #{_linear_with_affine_pre.1} parent=0 // pred_fallthru
    _
  // Predicated region
  $region10: #{_linear_with_affine_pre.1} parent=0 // pred_check
    _
  $region11: #{_linear_with_affine_pre.1} parent=0 // pred_check_branch
    %13 = sbr.rel (0) target = $region13
  $region12: #{_linear_with_affine_pre.1} parent=0 // pred_region
    _
  $region13: #{_linear_with_affine_pre.1} parent=0 // pred_fallthru
    _
  %v14 = vld [vmem:[%s0] sm:$0xff]
  %v15 = vld [vmem:[%s1] sm:$0xff]
  %v16 = vld [vmem:[%s1 + $0x8] sm:$0xff]
  %v17 = vld [vmem:[%s1 + $0x10] sm:$0xff]
  %v18 = vld [vmem:[%s1 + $0x18] sm:$0xff]
  %v19 = vld [vmem:[%s1 + $0x20] sm:$0xff]
  %v20 = vld [vmem:[%s1 + $0x28] sm:$0xff]
  %v21 = vld [vmem:[%s1 + $0x30] sm:$0xff]
  %v22 = vld [vmem:[%s1 + $0x38] sm:$0xff]
  %v23 = vld [vmem:[%s1 + $0x40] sm:$0xff]
  %v24 = vld [vmem:[%s1 + $0x48] sm:$0xff]
  %v25 = vld [vmem:[%s1 + $0x50] sm:$0xff]
  %v26 = vld [vmem:[%s1 + $0x58] sm:$0xff]
  %v27 = vld [vmem:[%s1 + $0x60] sm:$0xff]
  %v28 = vld [vmem:[%s1 + $0x68] sm:$0xff]
  %v29 = vld [vmem:[%s1 + $0x70] sm:$0xff]
  %v30 = vld [vmem:[%s1 + $0x78] sm:$0xff]
  %v31 = vld [vmem:[%s2] sm:$0x1]
  %v33 = vperm.slane %v31, 0
  %35 = vmatpush.msra.mxu0 %v30
  %36 = vmatpush.msra.mxu0 %v29
  %37 = vmatpush.msra.mxu0 %v28
  %38 = vmatpush.msra.mxu0 %v27
  %39 = vmatpush.msra.mxu0 %v26
  %40 = vmatpush.msra.mxu0 %v25
  %41 = vmatpush.msra.mxu0 %v24
  %42 = vmatpush.msra.mxu0 %v23
  %43 = vmatpush.msra.mxu0 %v22
  %44 = vmatpush.msra.mxu0 %v21
  %45 = vmatpush.msra.mxu0 %v20
  %46 = vmatpush.msra.mxu0 %v19
  %47 = vmatpush.msra.mxu0 %v18
  %48 = vmatpush.msra.mxu0 %v17
  %49 = vmatpush.msra.mxu0 %v16
  %50 = vmatpush.msra.mxu0 %v15
  %51 = vmatmul.f32.gmra.mxu0 %v14
  %v52 = vpop.f32.mrf.mxu0
  %v53 = vadd.f32 %v33, %v52
  %54 = vdwg.mxu0
  %55 = vst [vmem:[%s3] sm:$0xff] %v53
  // Predicated region
  $region14: #{_linear_with_affine_pre.1} parent=0 // pred_check
    _
  $region15: #{_linear_with_affine_pre.1} parent=0 // pred_check_branch
    %57 = sbr.rel (0) target = $region17
  $region16: #{_linear_with_affine_pre.1} parent=0 // pred_region
    _
  $region17: #{_linear_with_affine_pre.1} parent=0 // pred_fallthru
    _
  // Predicated region
  $region18: #{_linear_with_affine_pre.1} parent=0 // pred_check
    _
  $region19: #{_linear_with_affine_pre.1} parent=0 // pred_check_branch
    %59 = sbr.rel (0) target = $region21
  $region20: #{_linear_with_affine_pre.1} parent=0 // pred_region
    _
  $region21: #{_linear_with_affine_pre.1} parent=0 // pred_fallthru
    _

</llo_original>
